<compile_context>
chip_gen: v6e
topology: v6e:2x2x1
jax: 0.10.0
libtpu: 0.0.40
codegen_flags: <defaults>
</compile_context>

<pallas_src>
import math
import functools

import jax
import jax.numpy as jnp
from jax.experimental import pallas as pl
from jax.experimental.pallas import tpu as pltpu

_LANE = 128
_SUB = 8


def _dice_stats_kernel(x_ref, t_ref, ps_ref, tp_ref, nfg_ref, *,
                       n_valid, tile_vox, n_inner, first_masked_tile,
                       total_tiles, do_bg):
    """Accumulates per-(batch, core-split) dice statistics as per-lane partials.

    x_ref:   (C, TS, 128) logits tile (native dtype, upcast here)
    t_ref:   (1, TS, 128) raw labels tile
    ps_ref:  (C, 128)     sum of softmax probs per class          (accumulator)
    tp_ref:  (n_tp, 128)  foreground-masked prob sums per class   (accumulator)
    nfg_ref: (1, 128)     foreground voxel count                  (accumulator)
    """
    s = pl.program_id(1)
    n = pl.program_id(2)

    # Zero the resident accumulators on the first inner (spatial) step.
    @pl.when(n == 0)
    def _():
        ps_ref[...] = jnp.zeros_like(ps_ref)
        tp_ref[...] = jnp.zeros_like(tp_ref)
        nfg_ref[...] = jnp.zeros_like(nfg_ref)

    x = x_ref[...].astype(jnp.float32)            # (C, TS, 128)
    _, ts, lane = x.shape
    fg = t_ref[...] > 0                           # (1, TS, 128); target is binarized

    # Numerically stable softmax over the leading channel axis (VPU elementwise;
    # exp + approx reciprocal ride the EUP slot).
    m = jnp.max(x, axis=0, keepdims=True)
    e = jnp.exp(x - m)
    ssum = jnp.sum(e, axis=0, keepdims=True)
    pc = e * pl.reciprocal(ssum, approx=True)     # (C, TS, 128)

    def accumulate(pc_v, fg_v):
        fgf = fg_v.astype(jnp.float32)                        # (1, TS, 128)
        ps_ref[...] += jnp.sum(pc_v, axis=1)                  # (C, 128)
        nfg_ref[...] += jnp.sum(fgf, axis=1)                  # (1, 128)
        tp_fg = jnp.sum(pc_v[1:2] * fgf, axis=1)              # (1, 128)
        if do_bg:
            # class-0 tp is reconstructed in the epilogue as p_sum0 - fg_sum0
            tp_ref[0:1, :] += jnp.sum(pc_v[0:1] * fgf, axis=1)
            tp_ref[1:2, :] += tp_fg
        else:
            tp_ref[...] += tp_fg

    if first_masked_tile < total_tiles:
        # Only the final real tile (plus any clamped duplicate core-split tiles)
        # contains zero-pad / out-of-bounds garbage: gate the mask with pl.when
        # so every other grid step runs the unmasked fast path.
        gt = s * n_inner + n                      # global (unclamped) tile index

        @pl.when(gt >= first_masked_tile)
        def _():
            pos = (gt * tile_vox
                   + jax.lax.broadcasted_iota(jnp.int32, (1, ts, lane), 1) * lane
                   + jax.lax.broadcasted_iota(jnp.int32, (1, ts, lane), 2))
            valid = pos < n_valid
            accumulate(jnp.where(valid, pc, 0.0), jnp.logical_and(fg, valid))

        @pl.when(gt < first_masked_tile)
        def _():
            accumulate(pc, fg)
    else:
        accumulate(pc, fg)


def _vmem_capacity_bytes():
    try:
        info = pltpu.get_tpu_info()
        cap = getattr(info, "vmem_capacity_bytes", None)
        if cap:
            return int(cap)
    except Exception:
        pass
    return 64 * 1024 * 1024   # conservative fallback (v7x per-TensorCore)


@functools.partial(jax.jit, static_argnames=("do_bg", "block_rows"))
def soft_dice_loss(net_output, target, smooth=1e-5, do_bg=False, block_rows=None):
    """Equivalent of SoftDiceLoss(batch_dice=True, smooth, do_bg).forward.

    net_output: (B, C, D, H, W) float logits (any float dtype; upcast in-kernel)
    target:     (B, D, H, W) or (B, 1, D, H, W) integer / float labels
    `smooth` is a traced argument (no recompiles per value); `do_bg`/`block_rows`
    are static.
    """
    # TODO(synk): F.interpolate trilinear-resize branch (spatial-shape mismatch)
    # is not implemented; the kernel assumes net_output/target share spatial dims.
    B, C = int(net_output.shape[0]), int(net_output.shape[1])
    assert C >= 2, "SoftDiceLoss kernel expects at least 2 classes"
    N = int(math.prod(net_output.shape[2:]))

    x = net_output.reshape(B, C, N)     # native dtype; upcast happens in-kernel
    t = target.reshape(B, 1, N)         # raw labels; (t > 0) happens in-kernel

    # ---- spatial layout (rows, 128); pad only when N is not lane-aligned ----
    rows = pl.cdiv(N, _LANE)
    if rows * _LANE != N:
        # Minimal pad to the next lane multiple (full-HBM copy only in this rare
        # case); padded voxels are neutralized by the in-kernel mask.
        x = jnp.pad(x, ((0, 0), (0, 0), (0, rows * _LANE - N)))
        t = jnp.pad(t, ((0, 0), (0, 0), (0, rows * _LANE - N)))
    x = x.reshape(B, C, rows, _LANE)    # metadata-only reshape when lane-aligned
    t = t.reshape(B, 1, rows, _LANE)

    # ---- tile sizing against detected VMEM (64 MiB v7x, 128 MiB v5e/v6e) ----
    vmem_cap = _vmem_capacity_bytes()
    vmem_limit = int(min(vmem_cap * 3 // 4, 96 * 1024 * 1024))
    x_bytes = int(x.dtype.itemsize)
    t_bytes = int(t.dtype.itemsize)
    # double-buffered inputs + ~(5C+4) f32-sized per-voxel temporaries
    # (x_f32, x-m, e, pc, masked pc, max/denom/fg/mask) -> conservative so the
    # same code never overshoots v7x's smaller VMEM.
    per_vox = 2 * (C * x_bytes + t_bytes) + (5 * C + 4) * 4
    budget = vmem_limit * 3 // 4
    ts_max = max(_SUB, (budget // (per_vox * _LANE)) // _SUB * _SUB)
    ts_max = min(ts_max, 8192)
    if block_rows is not None:          # test / tuning override
        ts_max = min(ts_max, max(1, int(block_rows)))

    if rows <= ts_max:
        TS = rows                       # block dim == full dim is always legal
    else:
        TS = max(_SUB, (ts_max // _SUB) * _SUB)
    n_tiles = pl.cdiv(rows, TS)

    # ---- core-split axis: guarantee a >=2-extent parallel axis when B == 1 ----
    if B == 1 and n_tiles >= 2:
        s_par = 2
        n_inner = pl.cdiv(n_tiles, s_par)
    else:
        s_par, n_inner = 1, n_tiles
    total_tiles = s_par * n_inner       # >= n_tiles; extras are clamped + masked

    tile_vox = TS * _LANE
    # Only the last real tile can contain positions >= N (zero pad / OOB
    # garbage); clamped duplicate tiles are fully masked by the same check.
    first_masked_tile = n_tiles - 1 if n_tiles * tile_vox > N else n_tiles

    def in_map(b, s, n):
        gt = s * n_inner + n
        if total_tiles > n_tiles:       # static: clamp duplicated tail tiles
            gt = jnp.minimum(gt, n_tiles - 1)
        return (b, 0, gt, 0)

    n_tp = 2 if do_bg else 1
    acc_spec = lambda ch: pl.BlockSpec((None, None, ch, _LANE),
                                       lambda b, s, n: (b, s, 0, 0))
    acc_shape = lambda ch: jax.ShapeDtypeStruct((B, s_par, ch, _LANE), jnp.float32)

    kernel = functools.partial(
        _dice_stats_kernel,
        n_valid=N, tile_vox=tile_vox, n_inner=n_inner,
        first_masked_tile=first_masked_tile, total_tiles=total_tiles,
        do_bg=do_bg)

    ps_l, tp_l, nfg_l = pl.pallas_call(
        kernel,
        out_shape=(acc_shape(C), acc_shape(n_tp), acc_shape(1)),
        grid_spec=pltpu.PrefetchScalarGridSpec(
            num_scalar_prefetch=0,
            grid=(B, s_par, n_inner),
            in_specs=[
                pl.BlockSpec((None, C, TS, _LANE), in_map),
                pl.BlockSpec((None, 1, TS, _LANE), in_map),
            ],
            out_specs=[acc_spec(C), acc_spec(n_tp), acc_spec(1)],
        ),
        compiler_params=pltpu.CompilerParams(
            dimension_semantics=("parallel", "parallel", "arbitrary"),
            vmem_limit_bytes=vmem_limit,
        ),
    )(x, t)

    # ---- tiny plain-JAX epilogue: lane/core-split reduction + dice formula ----
    p_sum = ps_l.sum(axis=(1, 3))                 # (B, C)
    tp_acc = tp_l.sum(axis=(1, 3))                # (B, n_tp)
    n_fg = nfg_l.sum(axis=(1, 3))                 # (B, 1)

    zeros_rest = jnp.zeros((B, C - 2), jnp.float32)
    if do_bg:
        tp = jnp.concatenate(
            [p_sum[:, 0:1] - tp_acc[:, 0:1], tp_acc[:, 1:2], zeros_rest], axis=1)
        t_sum = jnp.concatenate([N - n_fg, n_fg, zeros_rest], axis=1)
        p_keep = p_sum
    else:
        tp = jnp.concatenate([tp_acc, zeros_rest], axis=1)      # classes 1..C-1
        t_sum = jnp.concatenate([n_fg, zeros_rest], axis=1)
        p_keep = p_sum[:, 1:]

    fp = p_keep - tp
    fn = t_sum - tp
    dice = (2.0 * tp + smooth) / (2.0 * tp + fp + fn + smooth)
    return jnp.mean(1.0 - dice)


def _reference_soft_dice_loss(net_output, target, smooth=1e-5, do_bg=False):
    """Pure-JAX reference mirroring the PyTorch module (correctness check)."""
    B, C = net_output.shape[0], net_output.shape[1]
    t_idx = jnp.clip((target > 0).astype(jnp.int32), 0, C - 1)
    if t_idx.ndim == net_output.ndim:
        t_idx = t_idx[:, 0]
    one_hot = jax.nn.one_hot(t_idx, C, axis=1, dtype=jnp.float32)
    pc = jax.nn.softmax(net_output.astype(jnp.float32), axis=1)
    if not do_bg:
        one_hot = one_hot[:, 1:]
        pc = pc[:, 1:]
    pc = pc.reshape(B, pc.shape[1], -1)
    one_hot = one_hot.reshape(B, one_hot.shape[1], -1)
    tp = (pc * one_hot).sum(-1)
    fp = pc.sum(-1) - tp
    fn = one_hot.sum(-1) - tp
    dice = (2 * tp + smooth) / (2 * tp + fp + fn + smooth)
    return (1 - dice).mean()


if __name__ == "__main__":
    key = jax.random.PRNGKey(0)
    ks = jax.random.split(key, 6)
    # approx EUP reciprocal in the softmax -> tolerance relaxed to ~3e-3
    TOL = dict(atol=3e-3, rtol=3e-3)

    # 1) Lane-aligned case: N = 4*16*16 = 1024 (zero-copy reshape, no masking).
    B, C, D, H, W = 2, 4, 4, 16, 16
    x1 = jax.random.normal(ks[0], (B, C, D, H, W), dtype=jnp.float32)
    t1 = jax.random.randint(ks[1], (B, D, H, W), 0, 3, dtype=jnp.int32)
    loss1 = jax.block_until_ready(soft_dice_loss(x1, t1))
    ref1 = _reference_soft_dice_loss(x1, t1)
    assert jnp.allclose(loss1, ref1, **TOL), (loss1, ref1)

    # 2) Ragged case: N = 3*5*7 = 105 (minimal lane pad + pl.when-gated tail mask).
    x2 = jax.random.normal(ks[2], (B, C, 3, 5, 7), dtype=jnp.float32)
    t2 = jax.random.randint(ks[3], (B, 3, 5, 7), 0, 3, dtype=jnp.int32)
    loss2 = jax.block_until_ready(soft_dice_loss(x2, t2))
    ref2 = _reference_soft_dice_loss(x2, t2)
    assert jnp.allclose(loss2, ref2, **TOL), (loss2, ref2)

    # 3) B == 1 core-split path: 2-way parallel spatial axis; odd tile count
    #    exercises the clamped + masked duplicate tail tile. N = 5*16*128.
    x3 = jax.random.normal(ks[4], (1, 3, 5, 16, 128), dtype=jnp.float32)
    t3 = jax.random.randint(ks[5], (1, 5, 16, 128), 0, 3, dtype=jnp.int32)
    loss3 = jax.block_until_ready(soft_dice_loss(x3, t3, block_rows=16))
    ref3 = _reference_soft_dice_loss(x3, t3)
    assert jnp.allclose(loss3, ref3, **TOL), (loss3, ref3)

    # 4) do_bg=True path (class-0 statistics kept).
    loss4 = jax.block_until_ready(soft_dice_loss(x1, t1, do_bg=True))
    ref4 = _reference_soft_dice_loss(x1, t1, do_bg=True)
    assert jnp.allclose(loss4, ref4, **TOL), (loss4, ref4)

    print("KERNEL_OK")
</pallas_src>

<mosaic_0001>
module attributes {stable_mosaic.version = 11 : i64} {
  func.func @_dice_stats_kernel(%arg0: i32, %arg1: i32, %arg2: i32, %arg3: memref<1x4x8x128xf32, #tpu.memory_space<vmem>>, %arg4: memref<1x1x8x128xi32, #tpu.memory_space<vmem>>, %arg5: memref<1x1x4x128xf32, #tpu.memory_space<vmem>>, %arg6: memref<1x1x1x128xf32, #tpu.memory_space<vmem>>, %arg7: memref<1x1x1x128xf32, #tpu.memory_space<vmem>>) attributes {dimension_semantics = [#tpu.dimension_semantics<parallel>, #tpu.dimension_semantics<parallel>, #tpu.dimension_semantics<arbitrary>], iteration_bounds = array<i64: 2, 1, 1>, scalar_prefetch = 0 : i64, scratch_operands = 0 : i64, tpu.core_type = #tpu.core_type<tc>, window_params = [{transform_indices = @transform_0, window_bounds = array<i64: 1, 4, 8, 128>}, {transform_indices = @transform_1, window_bounds = array<i64: 1, 1, 8, 128>}, {transform_indices = @transform_2, window_bounds = array<i64: 1, 1, 4, 128>}, {transform_indices = @transform_3, window_bounds = array<i64: 1, 1, 1, 128>}, {transform_indices = @transform_4, window_bounds = array<i64: 1, 1, 1, 128>}]} {
    %c0_i32 = arith.constant 0 : i32
    %0 = arith.cmpi eq, %arg2, %c0_i32 : i32
    %1 = arith.extui %0 : i1 to i32
    %c0_i32_0 = arith.constant 0 : i32
    %2 = arith.cmpi ne, %1, %c0_i32_0 : i32
    scf.if %2 {
      %cst_37 = arith.constant 0.000000e+00 : f32
      %44 = vector.broadcast %cst_37 : f32 to vector<4x128xf32>
      %c0_38 = arith.constant 0 : index
      %c0_39 = arith.constant 0 : index
      %c0_40 = arith.constant 0 : index
      %c0_41 = arith.constant 0 : index
      %45 = vector.load %arg5[%c0_38, %c0_39, %c0_40, %c0_41] : memref<1x1x4x128xf32, #tpu.memory_space<vmem>>, vector<1x1x4x128xf32>
      %46 = vector.shape_cast %45 : vector<1x1x4x128xf32> to vector<4x128xf32>
      %47 = vector.shape_cast %44 : vector<4x128xf32> to vector<1x1x4x128xf32>
      tpu.vector_store %arg5[%c0_38, %c0_39, %c0_40, %c0_41], %47 {strides = array<i32>} : memref<1x1x4x128xf32, #tpu.memory_space<vmem>>, vector<1x1x4x128xf32>,
      %cst_42 = arith.constant 0.000000e+00 : f32
      %48 = vector.broadcast %cst_42 : f32 to vector<1x128xf32>
      %c0_43 = arith.constant 0 : index
      %c0_44 = arith.constant 0 : index
      %c0_45 = arith.constant 0 : index
      %c0_46 = arith.constant 0 : index
      %49 = vector.load %arg6[%c0_43, %c0_44, %c0_45, %c0_46] : memref<1x1x1x128xf32, #tpu.memory_space<vmem>>, vector<1x1x1x128xf32>
      %50 = vector.shape_cast %49 : vector<1x1x1x128xf32> to vector<1x128xf32>
      %51 = vector.shape_cast %48 : vector<1x128xf32> to vector<1x1x1x128xf32>
      tpu.vector_store %arg6[%c0_43, %c0_44, %c0_45, %c0_46], %51 {strides = array<i32>} : memref<1x1x1x128xf32, #tpu.memory_space<vmem>>, vector<1x1x1x128xf32>,
      %cst_47 = arith.constant 0.000000e+00 : f32
      %52 = vector.broadcast %cst_47 : f32 to vector<1x128xf32>
      %c0_48 = arith.constant 0 : index
      %c0_49 = arith.constant 0 : index
      %c0_50 = arith.constant 0 : index
      %c0_51 = arith.constant 0 : index
      %53 = vector.load %arg7[%c0_48, %c0_49, %c0_50, %c0_51] : memref<1x1x1x128xf32, #tpu.memory_space<vmem>>, vector<1x1x1x128xf32>
      %54 = vector.shape_cast %53 : vector<1x1x1x128xf32> to vector<1x128xf32>
      %55 = vector.shape_cast %52 : vector<1x128xf32> to vector<1x1x1x128xf32>
      tpu.vector_store %arg7[%c0_48, %c0_49, %c0_50, %c0_51], %55 {strides = array<i32>} : memref<1x1x1x128xf32, #tpu.memory_space<vmem>>, vector<1x1x1x128xf32>,
    } else {
    }
    %c0 = arith.constant 0 : index
    %c0_1 = arith.constant 0 : index
    %c0_2 = arith.constant 0 : index
    %c0_3 = arith.constant 0 : index
    %3 = vector.load %arg3[%c0, %c0_1, %c0_2, %c0_3] : memref<1x4x8x128xf32, #tpu.memory_space<vmem>>, vector<1x4x8x128xf32>
    %4 = vector.shape_cast %3 : vector<1x4x8x128xf32> to vector<4x8x128xf32>
    %c0_4 = arith.constant 0 : index
    %c0_5 = arith.constant 0 : index
    %c0_6 = arith.constant 0 : index
    %c0_7 = arith.constant 0 : index
    %5 = vector.load %arg4[%c0_4, %c0_5, %c0_6, %c0_7] : memref<1x1x8x128xi32, #tpu.memory_space<vmem>>, vector<1x1x8x128xi32>
    %6 = vector.shape_cast %5 : vector<1x1x8x128xi32> to vector<1x8x128xi32>
    %c0_i32_8 = arith.constant 0 : i32
    %7 = vector.broadcast %c0_i32_8 : i32 to vector<1x8x128xi32>
    %8 = arith.cmpi sgt, %6, %7 : vector<1x8x128xi32>
    %cst = arith.constant dense<0xFF800000> : vector<8x128xf32>
    %9 = vector.multi_reduction <maximumf>, %4, %cst [0] : vector<4x8x128xf32> to vector<8x128xf32>
    %10 = vector.shape_cast %9 : vector<8x128xf32> to vector<1x8x128xf32>
    %11 = vector.broadcast %10 : vector<1x8x128xf32> to vector<4x8x128xf32>
    %12 = arith.subf %4, %11 : vector<4x8x128xf32>
    %13 = math.exp %12 : vector<4x8x128xf32>
    %cst_9 = arith.constant dense<0.000000e+00> : vector<8x128xf32>
    %14 = vector.multi_reduction <add>, %13, %cst_9 [0] : vector<4x8x128xf32> to vector<8x128xf32>
    %15 = vector.shape_cast %14 : vector<8x128xf32> to vector<1x8x128xf32>
    %16 = tpu.reciprocal %15 {approx = true} : vector<1x8x128xf32> -> vector<1x8x128xf32>
    %17 = vector.broadcast %16 : vector<1x8x128xf32> to vector<4x8x128xf32>
    %18 = arith.mulf %13, %17 : vector<4x8x128xf32>
    %19 = arith.extui %8 : vector<1x8x128xi1> to vector<1x8x128xi32>
    %20 = arith.sitofp %19 : vector<1x8x128xi32> to vector<1x8x128xf32>
    %c0_10 = arith.constant 0 : index
    %c0_11 = arith.constant 0 : index
    %c0_12 = arith.constant 0 : index
    %c0_13 = arith.constant 0 : index
    %21 = vector.load %arg5[%c0_10, %c0_11, %c0_12, %c0_13] : memref<1x1x4x128xf32, #tpu.memory_space<vmem>>, vector<1x1x4x128xf32>
    %22 = vector.shape_cast %21 : vector<1x1x4x128xf32> to vector<4x128xf32>
    %cst_14 = arith.constant dense<0.000000e+00> : vector<4x128xf32>
    %23 = vector.multi_reduction <add>, %18, %cst_14 [1] : vector<4x8x128xf32> to vector<4x128xf32>
    %24 = arith.addf %22, %23 : vector<4x128xf32>
    %c0_15 = arith.constant 0 : index
    %c0_16 = arith.constant 0 : index
    %c0_17 = arith.constant 0 : index
    %c0_18 = arith.constant 0 : index
    %25 = vector.load %arg5[%c0_15, %c0_16, %c0_17, %c0_18] : memref<1x1x4x128xf32, #tpu.memory_space<vmem>>, vector<1x1x4x128xf32>
    %26 = vector.shape_cast %25 : vector<1x1x4x128xf32> to vector<4x128xf32>
    %27 = vector.shape_cast %24 : vector<4x128xf32> to vector<1x1x4x128xf32>
    tpu.vector_store %arg5[%c0_15, %c0_16, %c0_17, %c0_18], %27 {strides = array<i32>} : memref<1x1x4x128xf32, #tpu.memory_space<vmem>>, vector<1x1x4x128xf32>,
    %c0_19 = arith.constant 0 : index
    %c0_20 = arith.constant 0 : index
    %c0_21 = arith.constant 0 : index
    %c0_22 = arith.constant 0 : index
    %28 = vector.load %arg7[%c0_19, %c0_20, %c0_21, %c0_22] : memref<1x1x1x128xf32, #tpu.memory_space<vmem>>, vector<1x1x1x128xf32>
    %29 = vector.shape_cast %28 : vector<1x1x1x128xf32> to vector<1x128xf32>
    %cst_23 = arith.constant dense<0.000000e+00> : vector<1x128xf32>
    %30 = vector.multi_reduction <add>, %20, %cst_23 [1] : vector<1x8x128xf32> to vector<1x128xf32>
    %31 = arith.addf %29, %30 : vector<1x128xf32>
    %c0_24 = arith.constant 0 : index
    %c0_25 = arith.constant 0 : index
    %c0_26 = arith.constant 0 : index
    %c0_27 = arith.constant 0 : index
    %32 = vector.load %arg7[%c0_24, %c0_25, %c0_26, %c0_27] : memref<1x1x1x128xf32, #tpu.memory_space<vmem>>, vector<1x1x1x128xf32>
    %33 = vector.shape_cast %32 : vector<1x1x1x128xf32> to vector<1x128xf32>
    %34 = vector.shape_cast %31 : vector<1x128xf32> to vector<1x1x1x128xf32>
    tpu.vector_store %arg7[%c0_24, %c0_25, %c0_26, %c0_27], %34 {strides = array<i32>} : memref<1x1x1x128xf32, #tpu.memory_space<vmem>>, vector<1x1x1x128xf32>,
    %35 = vector.extract_strided_slice %18 {offsets = [1, 0, 0], sizes = [1, 8, 128], strides = [1, 1, 1]} : vector<4x8x128xf32> to vector<1x8x128xf32>
    %36 = arith.mulf %35, %20 : vector<1x8x128xf32>
    %cst_28 = arith.constant dense<0.000000e+00> : vector<1x128xf32>
    %37 = vector.multi_reduction <add>, %36, %cst_28 [1] : vector<1x8x128xf32> to vector<1x128xf32>
    %c0_29 = arith.constant 0 : index
    %c0_30 = arith.constant 0 : index
    %c0_31 = arith.constant 0 : index
    %c0_32 = arith.constant 0 : index
    %38 = vector.load %arg6[%c0_29, %c0_30, %c0_31, %c0_32] : memref<1x1x1x128xf32, #tpu.memory_space<vmem>>, vector<1x1x1x128xf32>
    %39 = vector.shape_cast %38 : vector<1x1x1x128xf32> to vector<1x128xf32>
    %40 = arith.addf %39, %37 : vector<1x128xf32>
    %c0_33 = arith.constant 0 : index
    %c0_34 = arith.constant 0 : index
    %c0_35 = arith.constant 0 : index
    %c0_36 = arith.constant 0 : index
    %41 = vector.load %arg6[%c0_33, %c0_34, %c0_35, %c0_36] : memref<1x1x1x128xf32, #tpu.memory_space<vmem>>, vector<1x1x1x128xf32>
    %42 = vector.shape_cast %41 : vector<1x1x1x128xf32> to vector<1x128xf32>
    %43 = vector.shape_cast %40 : vector<1x128xf32> to vector<1x1x1x128xf32>
    tpu.vector_store %arg6[%c0_33, %c0_34, %c0_35, %c0_36], %43 {strides = array<i32>} : memref<1x1x1x128xf32, #tpu.memory_space<vmem>>, vector<1x1x1x128xf32>,
    return
  }
  func.func @transform_0(%arg0: i32, %arg1: i32, %arg2: i32) -> (i32, i32, i32, i32) {
    %c1_i32 = arith.constant 1 : i32
    %0 = arith.muli %arg1, %c1_i32 : i32
    %1 = arith.addi %0, %arg2 : i32
    %c0_i32 = arith.constant 0 : i32
    %c0_i32_0 = arith.constant 0 : i32
    %c0_i32_1 = arith.constant 0 : i32
    return %arg0, %c0_i32, %1, %c0_i32_0 : i32, i32, i32, i32
  }
  func.func @transform_1(%arg0: i32, %arg1: i32, %arg2: i32) -> (i32, i32, i32, i32) {
    %c1_i32 = arith.constant 1 : i32
    %0 = arith.muli %arg1, %c1_i32 : i32
    %1 = arith.addi %0, %arg2 : i32
    %c0_i32 = arith.constant 0 : i32
    %c0_i32_0 = arith.constant 0 : i32
    %c0_i32_1 = arith.constant 0 : i32
    return %arg0, %c0_i32, %1, %c0_i32_0 : i32, i32, i32, i32
  }
  func.func @transform_2(%arg0: i32, %arg1: i32, %arg2: i32) -> (i32, i32, i32, i32) {
    %c0_i32 = arith.constant 0 : i32
    %c0_i32_0 = arith.constant 0 : i32
    %c0_i32_1 = arith.constant 0 : i32
    return %arg0, %arg1, %c0_i32, %c0_i32_0 : i32, i32, i32, i32
  }
  func.func @transform_3(%arg0: i32, %arg1: i32, %arg2: i32) -> (i32, i32, i32, i32) {
    %c0_i32 = arith.constant 0 : i32
    %c0_i32_0 = arith.constant 0 : i32
    %c0_i32_1 = arith.constant 0 : i32
    return %arg0, %arg1, %c0_i32, %c0_i32_0 : i32, i32, i32, i32
  }
  func.func @transform_4(%arg0: i32, %arg1: i32, %arg2: i32) -> (i32, i32, i32, i32) {
    %c0_i32 = arith.constant 0 : i32
    %c0_i32_0 = arith.constant 0 : i32
    %c0_i32_1 = arith.constant 0 : i32
    return %arg0, %arg1, %c0_i32, %c0_i32_0 : i32, i32, i32, i32
  }
}

</mosaic_0001>

<llo_original>
// kernel: soft_dice_loss.1
$region0: #{soft_dice_loss.1}
  #allocation0 [shape = 'u32[]', space=smem, size = 0x4, offset = 0x4, fixed_abs, tag = 'smem constant byte address 0x4 - core index']
  #allocation1 [shape = 'u32[144,128]{1,0:T(1,128)}', space=vmem, size = 0x12000, scoped, tag = 'internal scratch']
  %s0 = inlined_call_operand.vmem [shape: f32[2,4,8,128], index: 0, kind: input, shape index: {}]
  %s1 = inlined_call_operand.vmem [shape: s32[2,1,8,128], index: 1, kind: input, shape index: {}]
  %s2 = inlined_call_operand.vmem [shape: f32[2,1,4,128], index: 2, kind: output, shape index: {0}]
  %s3 = inlined_call_operand.vmem [shape: f32[2,1,1,128], index: 3, kind: output, shape index: {1}]
  %s4 = inlined_call_operand.vmem [shape: f32[2,1,1,128], index: 4, kind: output, shape index: {2}]
  %5 = xla_tuple %s2, %s3, %s4
  %s6 = sld [smem:[#allocation0]]
  $region61: #{soft_dice_loss.1} parent=0
    _
  %s8 = ssub.s32 1, %s6
  %s9 = scalar_select 0, %s8, %s6
  loop: start=0, step=1, limit=4
  $region2: #{soft_dice_loss.1} parent=0 // loop_pre_header
    _
  $region3: #{soft_dice_loss.1} parent=0 // loop_header
    %s11 = sphi 0, %s15
    %p12 = scmp.ge.s32.totalorder %s11, 4
    %s18 = sphi 0, %s37
    %s19 = sphi 0, %s33
    %s20 = sphi 0, %s29
    %s21 = sphi 0, %s18
    %s22 = sphi 0, %s19
    %s23 = sphi 0, %s20
    %s24 = sphi 0, %s21
    %s25 = sphi 0, %s22
    %s26 = sphi 0, %s23
    %s44 = sphi 0, %s46
    %s47 = sphi 0, %s44
    %s48 = sphi 0, %s47
    %s64 = sphi 0, %s48
    %s74 = sphi 0, %s76
    %s77 = sphi 0, %s74
    %s78 = sphi 0, %s77
    %s94 = sphi 0, %s78
    %s102 = sphi 0, %s104
    %s105 = sphi 0, %s102
    %s106 = sphi 0, %s105
    %s122 = sphi 0, %s106
    %s130 = sphi 0, %s132
    %s133 = sphi 0, %s130
    %s134 = sphi 0, %s133
    %s150 = sphi 0, %s134
    %s158 = sphi 0, %s160
    %s161 = sphi 0, %s158
    %s162 = sphi 0, %s161
    %s178 = sphi 0, %s162
  $region4: #{soft_dice_loss.1} parent=0 // loop_header_branch
    %14 = sbr.rel (%p12) target = $region8
  $region5: #{soft_dice_loss.1} parent=0 // loop_body
    %s16 = ssub.s32 %s11, 1
    %s17 = ssub.s32 %s11, 2
    %s27 = sadd.s32 1, %s20
    %p28 = scmp.ge.s32.totalorder %s27, 1
    %s29 = scalar_select %p28, 0, %s27
    %s30 = sadd.s32 1, %s19
    %s31 = scalar_select %p28, %s30, %s19
    %p32 = scmp.ge.s32.totalorder %s31, 1
    %s33 = scalar_select %p32, 0, %s31
    %s34 = sadd.s32 1, %s18
    %s35 = scalar_select %p32, %s34, %s18
    %p36 = scmp.ge.s32.totalorder %s35, 2
    %s37 = scalar_select %p36, 0, %s35
    %s38 = sadd.s32 %s19, %s20
    %s39 = sadd.s32 %s33, %s29
    %s40 = ssub.s32 %s18, %s37
    %s41 = ssub.s32 %s38, %s39
    %s42 = sor.u32 %s40, %s41
    %p43 = scmp.eq.s32.totalorder %s42, 0
    %s45 = sadd.s32 %s44, 1
    %s46 = scalar_select %p43, %s44, %s45
    %p49 = pneg %p43
    %p50 = scmp.eq.s32.totalorder %s11, 1
    %p51 = por %p49, %p50
    %p52 = scmp.ne.s32.totalorder %s44, %s47
    %p53 = scmp.eq.s32.totalorder %s11, 0
    %p54 = por %p52, %p53
    %p55 = scmp.ne.s32.totalorder %s44, %s47
    %p56 = scmp.eq.s32.totalorder %s16, 1
    %p57 = por %p55, %p56
    %p58 = scmp.ne.s32.totalorder %s47, %s48
    %p59 = scmp.eq.s32.totalorder %s16, 0
    %p60 = por %p58, %p59
    %p61 = scmp.ne.s32.totalorder %s47, %s48
    %p62 = scmp.eq.s32.totalorder %s17, 1
    %p63 = por %p61, %p62
    %p65 = scmp.ne.s32.totalorder %s48, %s64
    %p66 = scmp.eq.s32.totalorder %s17, 0
    %p67 = por %p65, %p66
    %s68 = sadd.s32 %s19, %s20
    %s69 = sadd.s32 %s33, %s29
    %s70 = ssub.s32 %s18, %s37
    %s71 = ssub.s32 %s68, %s69
    %s72 = sor.u32 %s70, %s71
    %p73 = scmp.eq.s32.totalorder %s72, 0
    %s75 = sadd.s32 %s74, 1
    %s76 = scalar_select %p73, %s74, %s75
    %p79 = pneg %p73
    %p80 = scmp.eq.s32.totalorder %s11, 1
    %p81 = por %p79, %p80
    %p82 = scmp.ne.s32.totalorder %s74, %s77
    %p83 = scmp.eq.s32.totalorder %s11, 0
    %p84 = por %p82, %p83
    %p85 = scmp.ne.s32.totalorder %s74, %s77
    %p86 = scmp.eq.s32.totalorder %s16, 1
    %p87 = por %p85, %p86
    %p88 = scmp.ne.s32.totalorder %s77, %s78
    %p89 = scmp.eq.s32.totalorder %s16, 0
    %p90 = por %p88, %p89
    %p91 = scmp.ne.s32.totalorder %s77, %s78
    %p92 = scmp.eq.s32.totalorder %s17, 1
    %p93 = por %p91, %p92
    %p95 = scmp.ne.s32.totalorder %s78, %s94
    %p96 = scmp.eq.s32.totalorder %s17, 0
    %p97 = por %p95, %p96
    %s98 = ssub.s32 %s18, %s37
    %s99 = ssub.s32 %s19, %s33
    %s100 = sor.u32 %s98, %s99
    %p101 = scmp.eq.s32.totalorder %s100, 0
    %s103 = sadd.s32 %s102, 1
    %s104 = scalar_select %p101, %s102, %s103
    %p107 = pneg %p101
    %p108 = scmp.eq.s32.totalorder %s11, 1
    %p109 = por %p107, %p108
    %p110 = scmp.ne.s32.totalorder %s102, %s105
    %p111 = scmp.eq.s32.totalorder %s11, 0
    %p112 = por %p110, %p111
    %p113 = scmp.ne.s32.totalorder %s102, %s105
    %p114 = scmp.eq.s32.totalorder %s16, 1
    %p115 = por %p113, %p114
    %p116 = scmp.ne.s32.totalorder %s105, %s106
    %p117 = scmp.eq.s32.totalorder %s16, 0
    %p118 = por %p116, %p117
    %p119 = scmp.ne.s32.totalorder %s105, %s106
    %p120 = scmp.eq.s32.totalorder %s17, 1
    %p121 = por %p119, %p120
    %p123 = scmp.ne.s32.totalorder %s106, %s122
    %p124 = scmp.eq.s32.totalorder %s17, 0
    %p125 = por %p123, %p124
    %s126 = ssub.s32 %s18, %s37
    %s127 = ssub.s32 %s19, %s33
    %s128 = sor.u32 %s126, %s127
    %p129 = scmp.eq.s32.totalorder %s128, 0
    %s131 = sadd.s32 %s130, 1
    %s132 = scalar_select %p129, %s130, %s131
    %p135 = pneg %p129
    %p136 = scmp.eq.s32.totalorder %s11, 1
    %p137 = por %p135, %p136
    %p138 = scmp.ne.s32.totalorder %s130, %s133
    %p139 = scmp.eq.s32.totalorder %s11, 0
    %p140 = por %p138, %p139
    %p141 = scmp.ne.s32.totalorder %s130, %s133
    %p142 = scmp.eq.s32.totalorder %s16, 1
    %p143 = por %p141, %p142
    %p144 = scmp.ne.s32.totalorder %s133, %s134
    %p145 = scmp.eq.s32.totalorder %s16, 0
    %p146 = por %p144, %p145
    %p147 = scmp.ne.s32.totalorder %s133, %s134
    %p148 = scmp.eq.s32.totalorder %s17, 1
    %p149 = por %p147, %p148
    %p151 = scmp.ne.s32.totalorder %s134, %s150
    %p152 = scmp.eq.s32.totalorder %s17, 0
    %p153 = por %p151, %p152
    %s154 = ssub.s32 %s18, %s37
    %s155 = ssub.s32 %s19, %s33
    %s156 = sor.u32 %s154, %s155
    %p157 = scmp.eq.s32.totalorder %s156, 0
    %s159 = sadd.s32 %s158, 1
    %s160 = scalar_select %p157, %s158, %s159
    %p163 = pneg %p157
    %p164 = scmp.eq.s32.totalorder %s11, 1
    %p165 = por %p163, %p164
    %p166 = scmp.ne.s32.totalorder %s158, %s161
    %p167 = scmp.eq.s32.totalorder %s11, 0
    %p168 = por %p166, %p167
    %p169 = scmp.ne.s32.totalorder %s158, %s161
    %p170 = scmp.eq.s32.totalorder %s16, 1
    %p171 = por %p169, %p170
    %p172 = scmp.ne.s32.totalorder %s161, %s162
    %p173 = scmp.eq.s32.totalorder %s16, 0
    %p174 = por %p172, %p173
    %p175 = scmp.ne.s32.totalorder %s161, %s162
    %p176 = scmp.eq.s32.totalorder %s17, 1
    %p177 = por %p175, %p176
    %p179 = scmp.ne.s32.totalorder %s162, %s178
    %p180 = scmp.eq.s32.totalorder %s17, 0
    %p181 = por %p179, %p180
    %p182 = scmp.le.s32.totalorder 1, %s11
    %p183 = scmp.lt.s32.totalorder %s11, 3
    %p184 = pnand %p182, %p183
    %p185 = pneg %p184
    // Predicated region
    $region9: #{soft_dice_loss.1} parent=5 // pred_check
      _
    $region10: #{soft_dice_loss.1} parent=5 // pred_check_branch
      %187 = sbr.rel (%p184) target = $region12
    $region11: #{soft_dice_loss.1} parent=5 // pred_region
      %s188 = ssub.s32 %s11, 1
    $region12: #{soft_dice_loss.1} parent=5 // pred_fallthru
      _
    %p189 = scmp.lt.s32.totalorder %s11, 2
    // Predicated region
    $region13: #{soft_dice_loss.1} parent=5 // pred_check
      %p190 = pneg %p189
    $region14: #{soft_dice_loss.1} parent=5 // pred_check_branch
      %192 = sbr.rel (%p190) target = $region16
    $region15: #{soft_dice_loss.1} parent=5 // pred_region
      // Predicated region
      $region17: #{soft_dice_loss.1} parent=15 // pred_check
        %p193 = pneg %p54
      $region18: #{soft_dice_loss.1} parent=15 // pred_check_branch
        %195 = sbr.rel (%p193) target = $region20
      $region19: #{soft_dice_loss.1} parent=15 // pred_region
        %s196 = sadd.s32 %s19, %s20
        %p197 = scmp.lt.s32.totalorder %s18, 1
        %s198 = scalar_select %p197, %s18, 1
        %p199 = scmp.lt.s32.totalorder %s196, 0
        %s200 = scalar_select %p199, %s196, 0
        %s201 = smul.addr %s198, 4
        %s202 = sadd.s32 %s200, %s201
        %s203 = smul.addr %s202, 8
        %s204 = scalar_lea.vmem %s0, %s203
        %s205 = sadd.s32 %s19, %s20
      $region20: #{soft_dice_loss.1} parent=15 // pred_fallthru
        _
      // Predicated region
      $region21: #{soft_dice_loss.1} parent=15 // pred_check
        %p206 = pneg %p84
      $region22: #{soft_dice_loss.1} parent=15 // pred_check_branch
        %208 = sbr.rel (%p206) target = $region24
      $region23: #{soft_dice_loss.1} parent=15 // pred_region
        %s209 = sadd.s32 %s19, %s20
        %p210 = scmp.lt.s32.totalorder %s18, 1
        %s211 = scalar_select %p210, %s18, 1
        %p212 = scmp.lt.s32.totalorder %s209, 0
        %s213 = scalar_select %p212, %s209, 0
        %s214 = sadd.s32 %s213, %s211
        %s215 = smul.addr %s214, 8
        %s216 = scalar_lea.vmem %s1, %s215
        %s217 = sadd.s32 %s19, %s20
      $region24: #{soft_dice_loss.1} parent=15 // pred_fallthru
        _
    $region16: #{soft_dice_loss.1} parent=5 // pred_fallthru
      _
    %p218 = scmp.le.s32.totalorder 1, %s11
    %p219 = scmp.lt.s32.totalorder %s11, 3
    %p220 = pnand %p218, %p219
    %p221 = pneg %p220
    // Predicated region
    $region25: #{soft_dice_loss.1} parent=5 // pred_check
      _
    $region26: #{soft_dice_loss.1} parent=5 // pred_check_branch
      %223 = sbr.rel (%p220) target = $region28
    $region27: #{soft_dice_loss.1} parent=5 // pred_region
      %s224 = ssub.s32 %s11, 1
      %s225 = sadd.s32 %s22, %s23
      %p226 = scmp.lt.s32.totalorder %s21, 1
      %s227 = scalar_select %p226, %s21, 1
      %p228 = scmp.lt.s32.totalorder %s225, 0
      %s229 = scalar_select %p228, %s225, 0
      %s230 = smul.addr %s227, 4
      %s231 = sadd.s32 %s229, %s230
      %s232 = smul.addr %s231, 8
      %s233 = scalar_lea.vmem %s0, %s232
      %p234 = pneg %p60
      %p235 = pneg %p57
      %s236 = sadd.s32 %s22, %s23
      %p237 = scmp.lt.s32.totalorder %s21, 1
      %s238 = scalar_select %p237, %s21, 1
      %p239 = scmp.lt.s32.totalorder %s236, 0
      %s240 = scalar_select %p239, %s236, 0
      %s241 = sadd.s32 %s240, %s238
      %s242 = smul.addr %s241, 8
      %s243 = scalar_lea.vmem %s1, %s242
      %p244 = pneg %p90
      %p245 = pneg %p87
      %p246 = pneg %p118
      %p247 = pneg %p115
      %p248 = scmp.lt.s32.totalorder %s21, 1
      %s249 = scalar_select %p248, %s21, 1
      %p250 = scmp.lt.s32.totalorder %s22, 0
      %s251 = scalar_select %p250, %s22, 0
      %s252 = sadd.s32 %s251, %s249
      %s253 = smul.addr %s252, 4
      %s254 = scalar_lea.vmem %s2, %s253
      %p255 = pneg %p146
      %p256 = pneg %p143
      %p257 = scmp.lt.s32.totalorder %s21, 1
      %s258 = scalar_select %p257, %s21, 1
      %p259 = scmp.lt.s32.totalorder %s22, 0
      %s260 = scalar_select %p259, %s22, 0
      %s261 = sadd.s32 %s260, %s258
      %s262 = scalar_lea.vmem %s3, %s261
      %p263 = pneg %p174
      %p264 = pneg %p171
      %p265 = scmp.lt.s32.totalorder %s21, 1
      %s266 = scalar_select %p265, %s21, 1
      %p267 = scmp.lt.s32.totalorder %s22, 0
      %s268 = scalar_select %p267, %s22, 0
      %s269 = sadd.s32 %s268, %s266
      %s270 = scalar_lea.vmem %s4, %s269
      %s271 = sadd.s32 %s22, %s23
      %p272 = scmp.lt.s32.totalorder %s21, 1
      %s273 = scalar_select %p272, %s21, 1
      %p274 = scmp.lt.s32.totalorder %s271, 0
      %s275 = scalar_select %p274, %s271, 0
      %s276 = smul.addr %s273, 4
      %s277 = sadd.s32 %s275, %s276
      %s278 = smul.addr %s277, 8
      %s279 = scalar_lea.vmem %s0, %s278
      %s280 = sadd.s32 %s22, %s23
      %s281 = sadd.s32 %s22, %s23
      %p282 = scmp.lt.s32.totalorder %s21, 1
      %s283 = scalar_select %p282, %s21, 1
      %p284 = scmp.lt.s32.totalorder %s281, 0
      %s285 = scalar_select %p284, %s281, 0
      %s286 = sadd.s32 %s285, %s283
      %s287 = smul.addr %s286, 8
      %s288 = scalar_lea.vmem %s1, %s287
      %s289 = sadd.s32 %s22, %s23
      %p290 = scmp.lt.s32.totalorder %s21, 1
      %s291 = scalar_select %p290, %s21, 1
      %p292 = scmp.lt.s32.totalorder %s22, 0
      %s293 = scalar_select %p292, %s22, 0
      %s294 = sadd.s32 %s293, %s291
      %s295 = smul.addr %s294, 4
      %s296 = scalar_lea.vmem %s2, %s295
      %p297 = scmp.lt.s32.totalorder %s21, 1
      %s298 = scalar_select %p297, %s21, 1
      %p299 = scmp.lt.s32.totalorder %s22, 0
      %s300 = scalar_select %p299, %s22, 0
      %s301 = sadd.s32 %s300, %s298
      %s302 = scalar_lea.vmem %s3, %s301
      %p303 = scmp.lt.s32.totalorder %s21, 1
      %s304 = scalar_select %p303, %s21, 1
      %p305 = scmp.lt.s32.totalorder %s22, 0
      %s306 = scalar_select %p305, %s22, 0
      %s307 = sadd.s32 %s306, %s304
      %s308 = scalar_lea.vmem %s4, %s307
      %p309 = scmp.eq.s32.totalorder %s23, 0
      // Predicated region
      $region29: #{soft_dice_loss.1} parent=27 // pred_check
        %p310 = pneg %p309
      $region30: #{soft_dice_loss.1} parent=27 // pred_check_branch
        %312 = sbr.rel (%p310) target = $region32
      $region31: #{soft_dice_loss.1} parent=27 // pred_region
        %313 = vst [vmem:[%s296] sm:$0xf] 0.0
        %314 = vst [vmem:[%s302] sm:$0x1] 0.0
        %315 = vst [vmem:[%s308] sm:$0x1] 0.0
      $region32: #{soft_dice_loss.1} parent=27 // pred_fallthru
        _
      %v316 = vld [vmem:[%s279] sm:$0xff]
      %v317 = vld [vmem:[%s279 + $0x8] sm:$0xff]
      %v318 = vld [vmem:[%s279 + $0x10] sm:$0xff]
      %v319 = vld [vmem:[%s279 + $0x18] sm:$0xff]
      %v320 = vld [vmem:[%s288] sm:$0xff]
      %vm321 = vcmp.gt.s32.totalorder %v320, 0
      %v322 = vmax.f32 %v316, %v317
      %v323 = vmax.f32 %v318, %v319
      %v324 = vmax.f32 %v322, %v323
      %v325 = vsub.f32 %v316, %v324
      %v326 = vsub.f32 %v317, %v324
      %v327 = vsub.f32 %v318, %v324
      %v328 = vsub.f32 %v319, %v324
      %v329 = vmul.f32 %v325, 1.442695
      %v330 = vpow.pop %v329
      %v331 = vmul.f32 %v326, 1.442695
      %v332 = vpow.pop %v331
      %v333 = vmul.f32 %v327, 1.442695
      %v334 = vpow.pop %v333
      %v335 = vmul.f32 %v328, 1.442695
      %v336 = vpow.pop %v335
      %v337 = vadd.f32 %v330, %v332
      %v338 = vadd.f32 %v337, %v334
      %v339 = vadd.f32 %v338, %v336
      %v340 = vrcp.pop %v339
      %v341 = vmul.f32 %v330, %v340
      %v342 = vmul.f32 %v332, %v340
      %v343 = vmul.f32 %v334, %v340
      %v344 = vmul.f32 %v336, %v340
      %v345 = vsel %vm321, 1, 0
      %v346 = vcvt.s32.f32 %v345
      %v347 = vld [vmem:[%s296] sm:$0xf]
      %v348 = vrot.slane %v341, 4
      %v349 = vadd.f32 %v341, %v348
      %v350 = vrot.slane %v349, 2
      %v351 = vadd.f32 %v349, %v350
      %v352 = vrot.slane %v351, 1
      %v353 = vadd.f32 %v351, %v352
      %v354 = vrot.slane %v342, 4
      %v355 = vadd.f32 %v342, %v354
      %v356 = vrot.slane %v355, 2
      %v357 = vadd.f32 %v355, %v356
      %v358 = vrot.slane %v357, 1
      %v359 = vadd.f32 %v357, %v358
      %v360 = vrot.slane %v343, 4
      %v361 = vadd.f32 %v343, %v360
      %v362 = vrot.slane %v361, 2
      %v363 = vadd.f32 %v361, %v362
      %v364 = vrot.slane %v363, 1
      %v365 = vadd.f32 %v363, %v364
      %v366 = vrot.slane %v344, 4
      %v367 = vadd.f32 %v344, %v366
      %v368 = vrot.slane %v367, 2
      %v369 = vadd.f32 %v367, %v368
      %v370 = vrot.slane %v369, 1
      %v371 = vadd.f32 %v369, %v370
      %vm376 = vcmask 1041409
      %v377 = vsel %vm376, %v359, %v353
      %vm378 = vcmask 1042434
      %v379 = vsel %vm378, %v365, %v377
      %vm380 = vcmask 1043459
      %v381 = vsel %vm380, %v371, %v379
      %v383 = vadd.f32 %v347, %v381
      %384 = vst [vmem:[%s296] sm:$0xf] %v383
      %v385 = vld [vmem:[%s308] sm:$0x1]
      %v386 = vrot.slane %v346, 4
      %v387 = vadd.f32 %v346, %v386
      %v388 = vrot.slane %v387, 2
      %v389 = vadd.f32 %v387, %v388
      %v390 = vrot.slane %v389, 1
      %v391 = vadd.f32 %v389, %v390
      %v392 = vadd.f32 %v385, %v391
      %393 = vst [vmem:[%s308] sm:$0x1] %v392
      %v394 = vmul.f32 %v342, %v346
      %v395 = vrot.slane %v394, 4
      %v396 = vadd.f32 %v394, %v395
      %v397 = vrot.slane %v396, 2
      %v398 = vadd.f32 %v396, %v397
      %v399 = vrot.slane %v398, 1
      %v400 = vadd.f32 %v398, %v399
      %v401 = vld [vmem:[%s302] sm:$0x1]
      %v402 = vadd.f32 %v401, %v400
      %403 = vst [vmem:[%s302] sm:$0x1] %v402
      %p404 = scmp.lt.s32.totalorder %s21, 1
      %s405 = scalar_select %p404, %s21, 1
      %p406 = scmp.lt.s32.totalorder %s22, 0
      %s407 = scalar_select %p406, %s22, 0
      %s408 = sadd.s32 %s407, %s405
      %s409 = smul.addr %s408, 4
      %s410 = scalar_lea.vmem %s2, %s409
      %p411 = scmp.lt.s32.totalorder %s21, 1
      %s412 = scalar_select %p411, %s21, 1
      %p413 = scmp.lt.s32.totalorder %s22, 0
      %s414 = scalar_select %p413, %s22, 0
      %s415 = sadd.s32 %s414, %s412
      %s416 = scalar_lea.vmem %s3, %s415
      %p417 = scmp.lt.s32.totalorder %s21, 1
      %s418 = scalar_select %p417, %s21, 1
      %p419 = scmp.lt.s32.totalorder %s22, 0
      %s420 = scalar_select %p419, %s22, 0
      %s421 = sadd.s32 %s420, %s418
      %s422 = scalar_lea.vmem %s4, %s421
      // Predicated region
      $region33: #{soft_dice_loss.1} parent=27 // pred_check
        %p423 = pneg %p115
      $region34: #{soft_dice_loss.1} parent=27 // pred_check_branch
        %425 = sbr.rel (%p423) target = $region36
      $region35: #{soft_dice_loss.1} parent=27 // pred_region
        _
      $region36: #{soft_dice_loss.1} parent=27 // pred_fallthru
        _
      // Predicated region
      $region37: #{soft_dice_loss.1} parent=27 // pred_check
        %p426 = pneg %p143
      $region38: #{soft_dice_loss.1} parent=27 // pred_check_branch
        %428 = sbr.rel (%p426) target = $region40
      $region39: #{soft_dice_loss.1} parent=27 // pred_region
        _
      $region40: #{soft_dice_loss.1} parent=27 // pred_fallthru
        _
      // Predicated region
      $region41: #{soft_dice_loss.1} parent=27 // pred_check
        %p429 = pneg %p171
      $region42: #{soft_dice_loss.1} parent=27 // pred_check_branch
        %431 = sbr.rel (%p429) target = $region44
      $region43: #{soft_dice_loss.1} parent=27 // pred_region
        _
      $region44: #{soft_dice_loss.1} parent=27 // pred_fallthru
        _
    $region28: #{soft_dice_loss.1} parent=5 // pred_fallthru
      _
    %p432 = scmp.le.s32.totalorder 2, %s11
    // Predicated region
    $region45: #{soft_dice_loss.1} parent=5 // pred_check
      %p433 = pneg %p432
    $region46: #{soft_dice_loss.1} parent=5 // pred_check_branch
      %435 = sbr.rel (%p433) target = $region48
    $region47: #{soft_dice_loss.1} parent=5 // pred_region
      %s436 = ssub.s32 %s11, 2
      // Predicated region
      $region49: #{soft_dice_loss.1} parent=47 // pred_check
        %p437 = pneg %p121
      $region50: #{soft_dice_loss.1} parent=47 // pred_check_branch
        %439 = sbr.rel (%p437) target = $region52
      $region51: #{soft_dice_loss.1} parent=47 // pred_region
        %p440 = scmp.lt.s32.totalorder %s24, 1
        %s441 = scalar_select %p440, %s24, 1
        %p442 = scmp.lt.s32.totalorder %s25, 0
        %s443 = scalar_select %p442, %s25, 0
        %s444 = sadd.s32 %s443, %s441
        %s445 = smul.addr %s444, 4
        %s446 = scalar_lea.vmem %s2, %s445
      $region52: #{soft_dice_loss.1} parent=47 // pred_fallthru
        _
      // Predicated region
      $region53: #{soft_dice_loss.1} parent=47 // pred_check
        %p447 = pneg %p149
      $region54: #{soft_dice_loss.1} parent=47 // pred_check_branch
        %449 = sbr.rel (%p447) target = $region56
      $region55: #{soft_dice_loss.1} parent=47 // pred_region
        %p450 = scmp.lt.s32.totalorder %s24, 1
        %s451 = scalar_select %p450, %s24, 1
        %p452 = scmp.lt.s32.totalorder %s25, 0
        %s453 = scalar_select %p452, %s25, 0
        %s454 = sadd.s32 %s453, %s451
        %s455 = scalar_lea.vmem %s3, %s454
      $region56: #{soft_dice_loss.1} parent=47 // pred_fallthru
        _
      // Predicated region
      $region57: #{soft_dice_loss.1} parent=47 // pred_check
        %p456 = pneg %p177
      $region58: #{soft_dice_loss.1} parent=47 // pred_check_branch
        %458 = sbr.rel (%p456) target = $region60
      $region59: #{soft_dice_loss.1} parent=47 // pred_region
        %p459 = scmp.lt.s32.totalorder %s24, 1
        %s460 = scalar_select %p459, %s24, 1
        %p461 = scmp.lt.s32.totalorder %s25, 0
        %s462 = scalar_select %p461, %s25, 0
        %s463 = sadd.s32 %s462, %s460
        %s464 = scalar_lea.vmem %s4, %s463
      $region60: #{soft_dice_loss.1} parent=47 // pred_fallthru
        _
    $region48: #{soft_dice_loss.1} parent=5 // pred_fallthru
      _
  $region6: #{soft_dice_loss.1} parent=0 // loop_footer
    %s15 = sadd.s32 1, %s11
  $region7: #{soft_dice_loss.1} parent=0 // loop_footer_branch
    %10 = sbr.rel target = $region3
  $region8: #{soft_dice_loss.1} parent=0 // loop_exit
    _

</llo_original>
